<compile_context>
chip_gen: v7x
topology: tpu7x:2x2x1
jax: 0.10.0
libtpu: 0.0.40
codegen_flags: <defaults>
</compile_context>

<pallas_src>
import math

import jax
import jax.numpy as jnp
from jax.experimental import pallas as pl
from jax.experimental.pallas import tpu as pltpu

_EPS = 1e-6


def _round_up(x, m):
    return -(-x // m) * m


def _agent_loss_kernel(vw_ref, pred_ref, probs_ref, out_ref, acc_ref):
    """One grid step: accumulate the error sum over a TB-row slice of the batch.

    vw_ref    : (TB, 2)   columns = [values, winner]
    pred_ref  : (PB, 128) lane-dense view of this slice's pred_probs (PB = TB*A/128)
    probs_ref : (PB, 128) lane-dense view of this slice's probs
    out_ref   : (1, 1, 1) partial sum for this "parallel" split
    acc_ref   : (1, 1)    f32 running sum (VMEM scratch)
    """
    t = pl.program_id(1)

    @pl.when(t == 0)
    def _init():
        acc_ref[...] = jnp.zeros_like(acc_ref)

    # Value term: (values - winner)^2 summed over the rows of this block.
    vw = vw_ref[...]                                   # (TB, 2)
    value_rows = (vw[:, 0:1] - vw[:, 1:2]) ** 2        # (TB, 1)
    value_sum = jnp.sum(value_rows)

    # Policy term: sum(probs * log(pred + eps)).  The negation is hoisted into the
    # final combine (one VPU op less per element).  Explicit lane-first reduction.
    prod = probs_ref[...] * jnp.log(pred_ref[...] + _EPS)    # (PB, 128)
    lane_sums = jnp.sum(prod, axis=-1, keepdims=True)        # (PB, 1)  XLU lane reduce
    policy_sum = jnp.sum(lane_sums)                          # sublane reduce

    acc_ref[...] += value_sum - policy_sum

    @pl.when(t == pl.num_programs(1) - 1)
    def _finalize():
        out_ref[...] = acc_ref[...].reshape(out_ref.shape)


def _choose_tiling(batch, actions, tb_max=1024):
    # TB must be a multiple of 8 (sublanes) and make TB*A a multiple of 1024 so the
    # lane-dense policy view (TB*A/128, 128) has a sublane-aligned block row count.
    lane_q = 1024 // math.gcd(actions, 1024)
    row_align = (8 * lane_q) // math.gcd(8, lane_q)          # lcm(8, lane_q)
    n_par = 2 if batch >= 2 * row_align else 1               # both TCs on v7x for big B
    rows_per_split = -(-batch // n_par)
    tb = _round_up(min(tb_max, rows_per_split), row_align)
    # Keep each policy input block around <=1 MiB so double-buffered VMEM stays
    # modest on all generations (v7x: 64 MiB physical / 32 MiB default scoped).
    tb_cap = max(row_align, ((1 << 20) // max(1, 4 * actions)) // row_align * row_align)
    tb = min(tb, tb_cap)
    n_tiles = -(-rows_per_split // tb)
    return n_par, n_tiles, tb


def agent_loss(values, winner, pred_probs, probs):
    """values/winner: (B,) or (B,1) f32; pred_probs/probs: (B, A) f32 -> scalar f32."""
    pred_probs = jnp.asarray(pred_probs, jnp.float32)
    probs = jnp.asarray(probs, jnp.float32)
    batch, actions = probs.shape
    values = jnp.asarray(values, jnp.float32).reshape(batch, 1)
    winner = jnp.asarray(winner, jnp.float32).reshape(batch, 1)

    n_par, n_tiles, tb = _choose_tiling(batch, actions)
    b_pad = n_par * n_tiles * tb
    pad = b_pad - batch

    # Merge the two (B, 1) operands into one (B, 2) operand (fewer DMA descriptors).
    vw = jnp.concatenate([values, winner], axis=1)
    if pad:
        # Padded rows contribute exactly 0: values=winner=0, probs=0, pred=1.
        vw = jnp.pad(vw, ((0, pad), (0, 0)))
        pred_probs = jnp.pad(pred_probs, ((0, pad), (0, 0)), constant_values=1.0)
        probs = jnp.pad(probs, ((0, pad), (0, 0)))

    # Lane-dense layout: (B_pad, A) -> (B_pad*A/128, 128) so the dominant work runs
    # on full 128-lane vregs.
    pb_rows = b_pad * actions // 128
    pred_flat = pred_probs.reshape(pb_rows, 128)
    probs_flat = probs.reshape(pb_rows, 128)
    pb = tb * actions // 128                                  # policy rows per block

    cost = pl.CostEstimate(
        flops=4 * b_pad * actions + 4 * b_pad,
        transcendentals=b_pad * actions,
        bytes_accessed=4 * (2 * b_pad * actions + 2 * b_pad + n_par),
    )

    partials = pl.pallas_call(
        _agent_loss_kernel,
        out_shape=jax.ShapeDtypeStruct((n_par, 1, 1), jnp.float32),
        grid_spec=pltpu.PrefetchScalarGridSpec(
            num_scalar_prefetch=0,
            grid=(n_par, n_tiles),
            in_specs=[
                pl.BlockSpec((tb, 2), lambda p, t: (p * n_tiles + t, 0)),
                pl.BlockSpec((pb, 128), lambda p, t: (p * n_tiles + t, 0)),
                pl.BlockSpec((pb, 128), lambda p, t: (p * n_tiles + t, 0)),
            ],
            out_specs=pl.BlockSpec((1, 1, 1), lambda p, t: (p, 0, 0)),
            scratch_shapes=[pltpu.VMEM((1, 1), jnp.float32)],
        ),
        compiler_params=pltpu.CompilerParams(
            dimension_semantics=("parallel", "arbitrary")),
        cost_estimate=cost,
    )(vw, pred_flat, probs_flat)

    # Sum the per-split partial sums, then divide once by the true batch size.
    return jnp.sum(partials) / batch


def agent_loss_ref(values, winner, pred_probs, probs):
    values = jnp.asarray(values, jnp.float32)
    winner = jnp.asarray(winner, jnp.float32)
    value_error = (values - winner) ** 2
    policy_error = jnp.sum(-probs * jnp.log(pred_probs + _EPS), axis=1)
    return jnp.mean(value_error.reshape(-1) + policy_error)


if __name__ == "__main__":
    # Small shapes consistent with the forward: batch B, action dim A.
    B, A = 8, 32
    key = jax.random.PRNGKey(0)
    k1, k2, k3, k4 = jax.random.split(key, 4)

    values = jnp.tanh(jax.random.normal(k1, (B, 1), dtype=jnp.float32))
    winner = jnp.sign(jax.random.normal(k2, (B, 1), dtype=jnp.float32))
    pred_probs = jax.nn.softmax(jax.random.normal(k3, (B, A), dtype=jnp.float32), axis=1)
    probs = jax.nn.softmax(jax.random.normal(k4, (B, A), dtype=jnp.float32), axis=1)

    loss = agent_loss(values, winner, pred_probs, probs)
    jax.block_until_ready(loss)
    ref = agent_loss_ref(values, winner, pred_probs, probs)
    assert jnp.allclose(loss, ref, rtol=1e-5, atol=1e-5), (loss, ref)

    # Larger ragged batch: exercises batch padding, multi-block tiling and the
    # 2-way parallel split (two partial sums -> both TensorCores on v7x).
    B2, A2 = 300, 32
    k5, k6, k7, k8 = jax.random.split(jax.random.PRNGKey(1), 4)
    values2 = jnp.tanh(jax.random.normal(k5, (B2, 1), dtype=jnp.float32))
    winner2 = jnp.sign(jax.random.normal(k6, (B2, 1), dtype=jnp.float32))
    pred2 = jax.nn.softmax(jax.random.normal(k7, (B2, A2), dtype=jnp.float32), axis=1)
    probs2 = jax.nn.softmax(jax.random.normal(k8, (B2, A2), dtype=jnp.float32), axis=1)

    loss2 = agent_loss(values2, winner2, pred2, probs2)
    jax.block_until_ready(loss2)
    ref2 = agent_loss_ref(values2, winner2, pred2, probs2)
    assert jnp.allclose(loss2, ref2, rtol=1e-5, atol=1e-5), (loss2, ref2)

    print("KERNEL_OK")
</pallas_src>

<mosaic_0001>
module attributes {stable_mosaic.version = 11 : i64} {
  func.func @_agent_loss_kernel(%arg0: i32, %arg1: i32, %arg2: memref<32x2xf32, #tpu.memory_space<vmem>>, %arg3: memref<8x128xf32, #tpu.memory_space<vmem>>, %arg4: memref<8x128xf32, #tpu.memory_space<vmem>>, %arg5: memref<1x1x1xf32, #tpu.memory_space<vmem>>, %arg6: memref<1x1xf32, #tpu.memory_space<vmem>>) attributes {dimension_semantics = [#tpu.dimension_semantics<parallel>, #tpu.dimension_semantics<arbitrary>], iteration_bounds = array<i64: 1, 1>, scalar_prefetch = 0 : i64, scratch_operands = 1 : i64, tpu.core_type = #tpu.core_type<tc>, window_params = [{transform_indices = @transform_0, window_bounds = array<i64: 32, 2>}, {transform_indices = @transform_1, window_bounds = array<i64: 8, 128>}, {transform_indices = @transform_2, window_bounds = array<i64: 8, 128>}, {transform_indices = @transform_3, window_bounds = array<i64: 1, 1, 1>}]} {
    %c0_i32 = arith.constant 0 : i32
    %0 = arith.cmpi eq, %arg1, %c0_i32 : i32
    %1 = arith.extui %0 : i1 to i32
    %c0_i32_0 = arith.constant 0 : i32
    %2 = arith.cmpi ne, %1, %c0_i32_0 : i32
    scf.if %2 {
      %cst_15 = arith.constant 0.000000e+00 : f32
      %32 = vector.broadcast %cst_15 : f32 to vector<1x1xf32>
      %c0_16 = arith.constant 0 : index
      %c0_17 = arith.constant 0 : index
      %33 = vector.load %arg6[%c0_16, %c0_17] : memref<1x1xf32, #tpu.memory_space<vmem>>, vector<1x1xf32>
      tpu.vector_store %arg6[%c0_16, %c0_17], %32 {strides = array<i32>} : memref<1x1xf32, #tpu.memory_space<vmem>>, vector<1x1xf32>,
    } else {
    }
    %c0 = arith.constant 0 : index
    %c0_1 = arith.constant 0 : index
    %3 = vector.load %arg2[%c0, %c0_1] : memref<32x2xf32, #tpu.memory_space<vmem>>, vector<32x2xf32>
    %4 = vector.extract_strided_slice %3 {offsets = [0, 0], sizes = [32, 1], strides = [1, 1]} : vector<32x2xf32> to vector<32x1xf32>
    %5 = vector.extract_strided_slice %3 {offsets = [0, 1], sizes = [32, 1], strides = [1, 1]} : vector<32x2xf32> to vector<32x1xf32>
    %6 = arith.subf %4, %5 : vector<32x1xf32>
    %7 = arith.mulf %6, %6 : vector<32x1xf32>
    %8 = vector.shape_cast %7 : vector<32x1xf32> to vector<1x32x1xf32>
    %cst = arith.constant dense<0.000000e+00> : vector<1xf32>
    %9 = vector.multi_reduction <add>, %8, %cst [1, 2] : vector<1x32x1xf32> to vector<1xf32>
    %10 = vector.shape_cast %9 : vector<1xf32> to vector<1x1x1xf32>
    %11 = vector.extract %10[0, 0, 0] : f32 from vector<1x1x1xf32>
    %c0_2 = arith.constant 0 : index
    %c0_3 = arith.constant 0 : index
    %12 = vector.load %arg4[%c0_2, %c0_3] : memref<8x128xf32, #tpu.memory_space<vmem>>, vector<8x128xf32>
    %c0_4 = arith.constant 0 : index
    %c0_5 = arith.constant 0 : index
    %13 = vector.load %arg3[%c0_4, %c0_5] : memref<8x128xf32, #tpu.memory_space<vmem>>, vector<8x128xf32>
    %cst_6 = arith.constant 9.99999997E-7 : f32
    %14 = vector.broadcast %cst_6 : f32 to vector<8x128xf32>
    %15 = arith.addf %13, %14 : vector<8x128xf32>
    %16 = math.log %15 : vector<8x128xf32>
    %17 = arith.mulf %12, %16 : vector<8x128xf32>
    %cst_7 = arith.constant dense<0.000000e+00> : vector<8xf32>
    %18 = vector.multi_reduction <add>, %17, %cst_7 [1] : vector<8x128xf32> to vector<8xf32>
    %19 = vector.shape_cast %18 : vector<8xf32> to vector<8x1xf32>
    %20 = vector.shape_cast %19 : vector<8x1xf32> to vector<1x8x1xf32>
    %cst_8 = arith.constant dense<0.000000e+00> : vector<1xf32>
    %21 = vector.multi_reduction <add>, %20, %cst_8 [1, 2] : vector<1x8x1xf32> to vector<1xf32>
    %22 = vector.shape_cast %21 : vector<1xf32> to vector<1x1x1xf32>
    %23 = vector.extract %22[0, 0, 0] : f32 from vector<1x1x1xf32>
    %c0_9 = arith.constant 0 : index
    %c0_10 = arith.constant 0 : index
    %24 = vector.load %arg6[%c0_9, %c0_10] : memref<1x1xf32, #tpu.memory_space<vmem>>, vector<1x1xf32>
    %25 = arith.subf %11, %23 : f32
    %26 = vector.broadcast %25 : f32 to vector<1x1xf32>
    %27 = arith.addf %24, %26 : vector<1x1xf32>
    %c0_11 = arith.constant 0 : index
    %c0_12 = arith.constant 0 : index
    %28 = vector.load %arg6[%c0_11, %c0_12] : memref<1x1xf32, #tpu.memory_space<vmem>>, vector<1x1xf32>
    tpu.vector_store %arg6[%c0_11, %c0_12], %27 {strides = array<i32>} : memref<1x1xf32, #tpu.memory_space<vmem>>, vector<1x1xf32>,
    %c0_i32_13 = arith.constant 0 : i32
    %29 = arith.cmpi eq, %arg1, %c0_i32_13 : i32
    %30 = arith.extui %29 : i1 to i32
    %c0_i32_14 = arith.constant 0 : i32
    %31 = arith.cmpi ne, %30, %c0_i32_14 : i32
    scf.if %31 {
      %c0_15 = arith.constant 0 : index
      %c0_16 = arith.constant 0 : index
      %32 = vector.load %arg6[%c0_15, %c0_16] : memref<1x1xf32, #tpu.memory_space<vmem>>, vector<1x1xf32>
      %33 = vector.shape_cast %32 : vector<1x1xf32> to vector<1x1x1xf32>
      %c0_17 = arith.constant 0 : index
      %c0_18 = arith.constant 0 : index
      %c0_19 = arith.constant 0 : index
      %34 = vector.load %arg5[%c0_17, %c0_18, %c0_19] : memref<1x1x1xf32, #tpu.memory_space<vmem>>, vector<1x1x1xf32>
      tpu.vector_store %arg5[%c0_17, %c0_18, %c0_19], %33 {strides = array<i32>} : memref<1x1x1xf32, #tpu.memory_space<vmem>>, vector<1x1x1xf32>,
    } else {
    }
    return
  }
  func.func @transform_0(%arg0: i32, %arg1: i32) -> (i32, i32) {
    %c1_i32 = arith.constant 1 : i32
    %0 = arith.muli %arg0, %c1_i32 : i32
    %1 = arith.addi %0, %arg1 : i32
    %c0_i32 = arith.constant 0 : i32
    %c0_i32_0 = arith.constant 0 : i32
    return %1, %c0_i32 : i32, i32
  }
  func.func @transform_1(%arg0: i32, %arg1: i32) -> (i32, i32) {
    %c1_i32 = arith.constant 1 : i32
    %0 = arith.muli %arg0, %c1_i32 : i32
    %1 = arith.addi %0, %arg1 : i32
    %c0_i32 = arith.constant 0 : i32
    %c0_i32_0 = arith.constant 0 : i32
    return %1, %c0_i32 : i32, i32
  }
  func.func @transform_2(%arg0: i32, %arg1: i32) -> (i32, i32) {
    %c1_i32 = arith.constant 1 : i32
    %0 = arith.muli %arg0, %c1_i32 : i32
    %1 = arith.addi %0, %arg1 : i32
    %c0_i32 = arith.constant 0 : i32
    %c0_i32_0 = arith.constant 0 : i32
    return %1, %c0_i32 : i32, i32
  }
  func.func @transform_3(%arg0: i32, %arg1: i32) -> (i32, i32, i32) {
    %c0_i32 = arith.constant 0 : i32
    %c0_i32_0 = arith.constant 0 : i32
    %c0_i32_1 = arith.constant 0 : i32
    return %arg0, %c0_i32, %c0_i32_0 : i32, i32, i32
  }
}

</mosaic_0001>

<llo_original>
// kernel: tpu_custom_call.1
$region0: #{tpu_custom_call.1}
  #allocation0 [shape = 'u32[]', space=smem, size = 0x4, offset = 0x4, fixed_abs, tag = 'smem constant byte address 0x4 - core index']
  #allocation1 [shape = 'u32[144,128]{1,0:T(1,128)}', space=vmem, size = 0x12000, scoped, tag = 'internal scratch']
  #allocation2 [shape = 'f32[1,1]{1,0:T(1,128)}', space=vmem, size = 0x200, scoped, tag = 'scratch operand']
  %s0 = inlined_call_operand.vmem [shape: f32[32,2], index: 0, kind: input, shape index: {}]
  %s1 = inlined_call_operand.vmem [shape: f32[8,128], index: 1, kind: input, shape index: {}]
  %s2 = inlined_call_operand.vmem [shape: f32[8,128], index: 2, kind: input, shape index: {}]
  %s3 = inlined_call_operand.hbm [shape: f32[1,1,1], index: 3, kind: output, shape index: {}]
  %s4 = sld [smem:[#allocation0]]
  $region30: #{tpu_custom_call.1} parent=0
    _
  %s6 = ssub.s32 1, %s4
  %s7 = scalar_select 0, %s6, %s4
  $region1: #{tpu_custom_call.1} parent=0
    #allocation3 [shape = 'u8[512]{0}', space=vmem, size = 0x400, scoped, tag = 'output window, operand 0, single buffered']
    #allocation4 [shape = 's32[1]{0}', space=sflag, size = 0x4, scoped, tag = 'scoped memory for tpu_custom_call.1']
    %8 = vsyncpa [#allocation4], 0
    // Predicated region
    $region2: #{tpu_custom_call.1} parent=1 // pred_check
      _
    $region3: #{tpu_custom_call.1} parent=1 // pred_check_branch
      %10 = sbr.rel (0) target = $region5
    $region4: #{tpu_custom_call.1} parent=1 // pred_region
      %s11 = sadd.s32 0, 0
      %s12 = smul.u32 4, %s11
      %p13 = scmp.lt.s32.totalorder %s12, 3
      %s14 = scalar_select %p13, %s12, 3
      %s15 = smul.addr %s14, 8
      %s16 = scalar_lea.vmem %s0, %s15
      %s17 = sadd.s32 0, 0
      %s18 = smul.u32 4, %s17
    $region5: #{tpu_custom_call.1} parent=1 // pred_fallthru
      _
    // Predicated region
    $region6: #{tpu_custom_call.1} parent=1 // pred_check
      _
    $region7: #{tpu_custom_call.1} parent=1 // pred_check_branch
      %20 = sbr.rel (0) target = $region9
    $region8: #{tpu_custom_call.1} parent=1 // pred_region
      %s21 = sadd.s32 0, 0
      %p22 = scmp.lt.s32.totalorder %s21, 0
      %s23 = scalar_select %p22, %s21, 0
      %s24 = smul.addr %s23, 8
      %s25 = scalar_lea.vmem %s1, %s24
      %s26 = sadd.s32 0, 0
    $region9: #{tpu_custom_call.1} parent=1 // pred_fallthru
      _
    // Predicated region
    $region10: #{tpu_custom_call.1} parent=1 // pred_check
      _
    $region11: #{tpu_custom_call.1} parent=1 // pred_check_branch
      %28 = sbr.rel (0) target = $region13
    $region12: #{tpu_custom_call.1} parent=1 // pred_region
      %s29 = sadd.s32 0, 0
      %p30 = scmp.lt.s32.totalorder %s29, 0
      %s31 = scalar_select %p30, %s29, 0
      %s32 = smul.addr %s31, 8
      %s33 = scalar_lea.vmem %s2, %s32
      %s34 = sadd.s32 0, 0
    $region13: #{tpu_custom_call.1} parent=1 // pred_fallthru
      _
    %s35 = sadd.s32 0, 0
    %s36 = smul.u32 4, %s35
    %p37 = scmp.lt.s32.totalorder %s36, 3
    %s38 = scalar_select %p37, %s36, 3
    %s39 = smul.addr %s38, 8
    %s40 = scalar_lea.vmem %s0, %s39
    %s41 = sadd.s32 0, 0
    %p42 = scmp.lt.s32.totalorder %s41, 0
    %s43 = scalar_select %p42, %s41, 0
    %s44 = smul.addr %s43, 8
    %s45 = scalar_lea.vmem %s1, %s44
    %s46 = sadd.s32 0, 0
    %p47 = scmp.lt.s32.totalorder %s46, 0
    %s48 = scalar_select %p47, %s46, 0
    %s49 = smul.addr %s48, 8
    %s50 = scalar_lea.vmem %s2, %s49
    %s51 = sadd.s32 0, 0
    %s52 = smul.u32 4, %s51
    %p53 = scmp.lt.s32.totalorder %s52, 3
    %s54 = scalar_select %p53, %s52, 3
    %s55 = smul.addr %s54, 8
    %s56 = scalar_lea.vmem %s0, %s55
    %s57 = sadd.s32 0, 0
    %s58 = smul.u32 4, %s57
    %s59 = sadd.s32 0, 0
    %p60 = scmp.lt.s32.totalorder %s59, 0
    %s61 = scalar_select %p60, %s59, 0
    %s62 = smul.addr %s61, 8
    %s63 = scalar_lea.vmem %s1, %s62
    %s64 = sadd.s32 0, 0
    %s65 = sadd.s32 0, 0
    %p66 = scmp.lt.s32.totalorder %s65, 0
    %s67 = scalar_select %p66, %s65, 0
    %s68 = smul.addr %s67, 8
    %s69 = scalar_lea.vmem %s2, %s68
    %s70 = sadd.s32 0, 0
    %p71 = scmp.eq.s32.totalorder 0, 0
    // Predicated region
    $region14: #{tpu_custom_call.1} parent=1 // pred_check
      %p72 = pneg %p71
    $region15: #{tpu_custom_call.1} parent=1 // pred_check_branch
      %74 = sbr.rel (%p72) target = $region17
    $region16: #{tpu_custom_call.1} parent=1 // pred_region
      %vm75 = vcmask 0
      %76 = vst.msk [vmem:[#allocation2] sm:$0x1] %vm75, 0.0
    $region17: #{tpu_custom_call.1} parent=1 // pred_fallthru
      _
    %v77 = vld [vmem:[%s56] sm:$0xff]
    %v78 = vld [vmem:[%s56 + $0x8] sm:$0xff]
    %v79 = vld [vmem:[%s56 + $0x10] sm:$0xff]
    %v80 = vld [vmem:[%s56 + $0x18] sm:$0xff]
    %85 = vrot.lane.b32.xlu0 %v77, 127
    %v86 = vpop.permute.xlu0 %85
    %87 = vrot.lane.b32.xlu0 %v78, 127
    %v88 = vpop.permute.xlu0 %87
    %89 = vrot.lane.b32.xlu0 %v79, 127
    %v90 = vpop.permute.xlu0 %89
    %91 = vrot.lane.b32.xlu0 %v80, 127
    %v92 = vpop.permute.xlu0 %91
    %v97 = vsub.f32 %v77, %v86
    %v98 = vsub.f32 %v78, %v88
    %v99 = vsub.f32 %v79, %v90
    %v100 = vsub.f32 %v80, %v92
    %v101 = vmul.f32 %v97, %v97
    %v102 = vmul.f32 %v98, %v98
    %v103 = vmul.f32 %v99, %v99
    %v104 = vmul.f32 %v100, %v100
    %vm105 = vcmask 7168
    %v106 = vsel %vm105, %v101, 0.0
    %v107 = vsel %vm105, %v102, 0.0
    %v108 = vadd.f32 %v106, %v107
    %v109 = vsel %vm105, %v103, 0.0
    %v110 = vadd.f32 %v108, %v109
    %v111 = vsel %vm105, %v104, 0.0
    %v112 = vadd.f32 %v110, %v111
    %113 = vadd.xlane.f32.xlu0 %v112
    %v114 = vpop.xlane.xlu0 %113
    %v115 = vrot.slane %v114, 4
    %v116 = vadd.f32 %v114, %v115
    %v117 = vrot.slane %v116, 2
    %v118 = vadd.f32 %v116, %v117
    %v119 = vrot.slane %v118, 1
    %v120 = vadd.f32 %v118, %v119
    %s121 = vtos %v120
    %v122 = vld [vmem:[%s69] sm:$0xff]
    %v123 = vld [vmem:[%s63] sm:$0xff]
    %v124 = vadd.f32 %v123, 1e-06
    %v125 = vlog2.pop %v124
    %v126 = vmul.f32 %v125, 0.6931472
    %v127 = vmul.f32 %v122, %v126
    %128 = vadd.xlane.f32.xlu0 %v127
    %v129 = vpop.xlane.xlu0 %128
    %v130 = vsel %vm105, %v129, 0.0
    %131 = vadd.xlane.f32.xlu0 %v130
    %v132 = vpop.xlane.xlu0 %131
    %v133 = vrot.slane %v132, 4
    %v134 = vadd.f32 %v132, %v133
    %v135 = vrot.slane %v134, 2
    %v136 = vadd.f32 %v134, %v135
    %v137 = vrot.slane %v136, 1
    %v138 = vadd.f32 %v136, %v137
    %s139 = vtos %v138
    %v140 = vld [vmem:[#allocation2] sm:$0x1]
    %s141 = ssub.f32 %s121, %s139
    %v142 = vstv %s141
    %v143 = vadd.f32 %v140, %v142
    %vm144 = vcmask 0
    %145 = vst.msk [vmem:[#allocation2] sm:$0x1] %vm144, %v143
    // Predicated region
    $region18: #{tpu_custom_call.1} parent=1 // pred_check
      %p146 = pneg %p71
    $region19: #{tpu_custom_call.1} parent=1 // pred_check_branch
      %148 = sbr.rel (%p146) target = $region21
    $region20: #{tpu_custom_call.1} parent=1 // pred_region
      %v149 = vld [vmem:[#allocation2] sm:$0x1]
      %150 = vst.msk [vmem:[#allocation3] sm:$0x1] %vm144, %v149
    $region21: #{tpu_custom_call.1} parent=1 // pred_fallthru
      _
    // Predicated region
    $region22: #{tpu_custom_call.1} parent=1 // pred_check
      _
    $region23: #{tpu_custom_call.1} parent=1 // pred_check_branch
      %152 = sbr.rel (0) target = $region25
    $region24: #{tpu_custom_call.1} parent=1 // pred_region
      %s154 = ssub.s32 16, 16
      %155 = vsyncadd [#allocation4], %s154
      %s157 = sshll.u32 [#allocation3], 4
      %s158 = int_to_ptr.vmem [resolvable:$true] %s157
      %160 = dma.vmem_to_hbm [thread:$0]  %s158, 16, %s3, [#allocation4]
    $region25: #{tpu_custom_call.1} parent=1 // pred_fallthru
      _
    // Predicated region
    $region26: #{tpu_custom_call.1} parent=1 // pred_check
      _
    $region27: #{tpu_custom_call.1} parent=1 // pred_check_branch
      %162 = sbr.rel (0) target = $region29
    $region28: #{tpu_custom_call.1} parent=1 // pred_region
      %163 = dma.done [#allocation4], 16
    $region29: #{tpu_custom_call.1} parent=1 // pred_fallthru
      _
    %164 = vsyncpa [#allocation4], 1

</llo_original>
